<compile_context>
chip_gen: v5e
topology: v5e:2x2
jax: 0.10.0
libtpu: 0.0.40
codegen_flags: <defaults>
</compile_context>

<pallas_src>
import jax
import jax.numpy as jnp
from jax.experimental import pallas as pl
from jax.experimental.pallas import tpu as pltpu


LANE = 128
SUBLANE = 8


def _round_up(n, m):
    return ((n + m - 1) // m) * m


def _cdiv(a, b):
    return -(-a // b)


def _pad_to(arr, shape):
    pads = [(0, s - d) for d, s in zip(arr.shape, shape)]
    return jnp.pad(arr, pads)


def _vmem_capacity_bytes():
    try:
        return int(pltpu.get_tpu_info().vmem_capacity_bytes)
    except Exception:
        return 64 * 1024 * 1024          # conservative (v7x per-TC VMEM)


def _const_spec(shape, index_map):
    """BlockSpec for a grid-invariant operand: single-buffer it (its index_map is
    constant, so double buffering is pure VMEM waste).  Falls back gracefully if
    the running jax version does not support pipeline_mode."""
    try:
        return pl.BlockSpec(shape, index_map, pipeline_mode=pl.Buffered(1))
    except Exception:
        return pl.BlockSpec(shape, index_map)


def _choose_tiles(T, B, Ip, Hp, u_itemsize, budget_bytes, tc_target):
    """Pick (batch block Bb, time chunk Tc) so the kernel's VMEM working set fits
    the per-generation budget.  Prefer the whole batch in one shard (best on
    1-TC chips); shard the batch only when needed for VMEM (also enables
    megacore batch parallelism on v7x)."""
    # W (Buffered(1)) + U (Buffered(1)) + biases.
    fixed = Ip * Hp * 4 + Hp * Hp * u_itemsize + 4 * Hp * 4

    def need(bb, tc):
        x_blk = tc * bb * Ip * 4          # double-buffered input chunk
        o_blk = tc * bb * Hp * 4          # double-buffered output chunk
        tmp = tc * bb * Hp * 4            # projection matmul temporary
        h_scr = bb * Hp * 4               # carried hidden state
        return fixed + 2 * x_blk + 2 * o_blk + tmp + h_scr

    bb = _round_up(B, SUBLANE)
    while True:
        tc = max(1, min(tc_target, T))
        while tc > 1 and need(bb, tc) > budget_bytes:
            tc //= 2
        if need(bb, tc) <= budget_bytes or bb <= SUBLANE:
            return bb, tc
        bb = _round_up(_cdiv(bb, 2), SUBLANE)   # shard batch further


# ----------------------------------------------------------------------------
# Fused kernel: chunk input-projection + time recurrence (h carried in VMEM)
# ----------------------------------------------------------------------------
def _make_fused_kernel(tc, bb, ip, hp, unroll):
    def kernel(scal_ref, x_ref, w_ref, u_ref, bg_ref, bd_ref, out_ref, h_scr):
        # Reset carried hidden state at the first time chunk of each batch shard.
        @pl.when(pl.program_id(1) == 0)
        def _():
            h_scr[...] = jnp.zeros_like(h_scr)

        # ---- Fused input projection for the whole time chunk ---------------
        # One lane-dense (Tc*Bb, I)@(I, Hp) matmul; bias_gate folded in.  The
        # result is staged directly in the output VMEM block (overwritten below
        # with the hidden states), so no extra scratch and no HBM round trip.
        x2 = x_ref[...].reshape(tc * bb, ip)
        proj = jnp.dot(x2, w_ref[...], preferred_element_type=jnp.float32)
        out_ref[...] = (proj + bg_ref[...]).reshape(tc, bb, hp)

        # ---- Recurrence -----------------------------------------------------
        u = u_ref[...]                                    # (Hp, Hp), f32 or bf16
        # Hoist per-step broadcasts out of the unrolled loop (JAX does not CSE
        # broadcast_in_dim; with unroll they would be re-materialized each step).
        bd_full = jnp.broadcast_to(bd_ref[...], (bb, hp))           # bu - bg
        zeta_v = jnp.full((bb, hp), scal_ref[0], jnp.float32)       # sigmoid(zeta)
        zn_v = jnp.full((bb, hp), scal_ref[1], jnp.float32)         # sig(zeta)+sig(nu)

        def step(i, h):
            # pre = (x_t @ W + bias_gate) + h_{t-1} @ U  (projection precomputed)
            pre = out_ref[i] + jnp.dot(h.astype(u.dtype), u,
                                       preferred_element_type=jnp.float32)
            z = jax.nn.sigmoid(pre)                       # gate nonlinearity
            c = jnp.tanh(pre + bd_full)                   # update nonlinearity
            # h_t = z*h + (sig(zeta)*(1-z)+sig(nu))*c == z*(h - sz*c) + (sz+sn)*c
            h_new = z * (h - zeta_v * c) + zn_v * c
            out_ref[i] = h_new
            return h_new

        h_scr[...] = jax.lax.fori_loop(0, tc, step, h_scr[...], unroll=unroll)

    return kernel


# ----------------------------------------------------------------------------
# Wrapper
# ----------------------------------------------------------------------------
def fastgrnn_forward(x, W, U, bias_gate, bias_update, zeta, nu, *,
                     recurrent_matmul_dtype=jnp.float32, tc_target=32):
    """x: (T, B, I) float32.  Returns hidden states (T, B, H) (zero init state).

    recurrent_matmul_dtype=jnp.bfloat16 casts U and the h operand of the serial
    MXU matmul to bf16 (f32 accumulation): ~3x fewer MXU passes per step on the
    critical path, at slightly relaxed numerics.  Gating math stays f32.
    """
    T, B, I = x.shape
    H = W.shape[1]
    Hp = _round_up(H, LANE)       # lane-dense hidden width
    Ip = _round_up(I, SUBLANE)    # sublane-aligned input width

    cap = _vmem_capacity_bytes()
    tile_budget = int(cap * 0.6)  # leave headroom for compiler scratch/temps
    u_itemsize = jnp.dtype(recurrent_matmul_dtype).itemsize

    bb, tc = _choose_tiles(T, B, Ip, Hp, u_itemsize, tile_budget, tc_target)
    nB = _cdiv(B, bb)
    Bp = nB * bb
    nT = _cdiv(T, tc)
    Tp = nT * tc                  # pad T (robust for odd/prime T; tail sliced off)

    x_pad = _pad_to(x.astype(jnp.float32), (Tp, Bp, Ip))
    Wp = _pad_to(W.astype(jnp.float32), (Ip, Hp))
    Up = _pad_to(U.astype(jnp.float32), (Hp, Hp)).astype(recurrent_matmul_dtype)
    bg = _pad_to(bias_gate.astype(jnp.float32), (1, Hp))
    bu = _pad_to(bias_update.astype(jnp.float32), (1, Hp))
    bd = bu - bg                  # per-step bias delta (bias_gate folded into proj)

    # Precompute scalar blend coefficients once; passed via SMEM.
    zeta_s = jax.nn.sigmoid(zeta.astype(jnp.float32)).reshape(())
    nu_s = jax.nn.sigmoid(nu.astype(jnp.float32)).reshape(())
    scal = jnp.stack([zeta_s, zeta_s + nu_s])       # (2,) f32

    # Cap the unroll when the per-step live intermediates get big (vreg spill).
    unroll = 8 if bb * Hp <= 16 * 1024 else 4
    kernel = _make_fused_kernel(tc, bb, Ip, Hp, unroll)

    hs = pl.pallas_call(
        kernel,
        out_shape=jax.ShapeDtypeStruct((Tp, Bp, Hp), jnp.float32),
        grid_spec=pltpu.PrefetchScalarGridSpec(
            num_scalar_prefetch=0,
            grid=(nB, nT),
            in_specs=[
                pl.BlockSpec(memory_space=pltpu.MemorySpace.SMEM),   # [sz, sz+sn]
                pl.BlockSpec((tc, bb, Ip), lambda b, t: (t, b, 0)),  # x chunk
                _const_spec((Ip, Hp), lambda b, t: (0, 0)),          # W
                _const_spec((Hp, Hp), lambda b, t: (0, 0)),          # U
                _const_spec((1, Hp), lambda b, t: (0, 0)),           # bias_gate
                _const_spec((1, Hp), lambda b, t: (0, 0)),           # bu - bg
            ],
            out_specs=pl.BlockSpec((tc, bb, Hp), lambda b, t: (t, b, 0)),
            scratch_shapes=[pltpu.VMEM((bb, Hp), jnp.float32)],      # carried h
        ),
        compiler_params=pltpu.CompilerParams(
            # batch shards independent (megacore on v7x); time is sequential
            dimension_semantics=("parallel", "arbitrary"),
            vmem_limit_bytes=int(cap * 0.85),
        ),
    )(scal, x_pad, Wp, Up, bg, bd)

    if (Tp, Bp, Hp) == (T, B, H):
        return hs
    # TODO(synk): optionally return the padded (Tp,Bp,Hp) buffer to downstream
    # consumers to skip this extra HBM pass when H << 128.
    return hs[:T, :B, :H]


# ----------------------------------------------------------------------------
# Pure-JAX reference matching FastGRNNCell semantics (zero initial state)
# ----------------------------------------------------------------------------
def fastgrnn_reference(x, W, U, bias_gate, bias_update, zeta, nu):
    T, B, I = x.shape
    H = W.shape[1]
    h0 = jnp.zeros((B, H), jnp.float32)
    zs = jax.nn.sigmoid(zeta)
    ns = jax.nn.sigmoid(nu)

    def step(h, x_t):
        pre = x_t @ W + h @ U
        z = jax.nn.sigmoid(pre + bias_gate)
        c = jnp.tanh(pre + bias_update)
        h_new = z * h + (zs * (1.0 - z) + ns) * c
        return h_new, h_new

    _, hs = jax.lax.scan(step, h0, x)
    return hs


if __name__ == "__main__":
    # Small shapes consistent with the module.
    T, B, I, H = 8, 2, 4, 32

    key = jax.random.PRNGKey(0)
    kx, kw, ku = jax.random.split(key, 3)

    # Parameter init mirroring FastGRNNCell.__init__ (wRank=None, uRank=None):
    #   W, U = 0.1*randn; biases = ones; zeta = 1.0; nu = -4.0.
    W = 0.1 * jax.random.normal(kw, (I, H), jnp.float32)
    U = 0.1 * jax.random.normal(ku, (H, H), jnp.float32)
    bias_gate = jnp.ones((1, H), jnp.float32)
    bias_update = jnp.ones((1, H), jnp.float32)
    zeta = 1.0 * jnp.ones((1, 1), jnp.float32)
    nu = -4.0 * jnp.ones((1, 1), jnp.float32)

    x = jax.random.normal(kx, (T, B, I), jnp.float32)   # [timeSteps, batch, inputDims]

    ref = fastgrnn_reference(x, W, U, bias_gate, bias_update, zeta, nu)

    # f32-exact path.
    out = fastgrnn_forward(x, W, U, bias_gate, bias_update, zeta, nu)
    out = jax.block_until_ready(out)
    assert out.shape == (T, B, H)
    assert jnp.allclose(out, ref, atol=1e-4, rtol=1e-4), float(jnp.abs(out - ref).max())

    # bf16 recurrent-matmul path (f32 accumulation) — relaxed tolerance.
    out_bf16 = fastgrnn_forward(x, W, U, bias_gate, bias_update, zeta, nu,
                                recurrent_matmul_dtype=jnp.bfloat16)
    out_bf16 = jax.block_until_ready(out_bf16)
    assert jnp.allclose(out_bf16, ref, atol=5e-2, rtol=5e-2), \
        float(jnp.abs(out_bf16 - ref).max())

    print("KERNEL_OK")
</pallas_src>

<mosaic_0001>
module attributes {stable_mosaic.version = 11 : i64} {
  func.func @kernel(%arg0: i32, %arg1: i32, %arg2: memref<2xf32, #tpu.memory_space<smem>>, %arg3: memref<8x8x8xf32, #tpu.memory_space<vmem>>, %arg4: memref<8x128xf32, #tpu.memory_space<vmem>>, %arg5: memref<128x128xf32, #tpu.memory_space<vmem>>, %arg6: memref<1x128xf32, #tpu.memory_space<vmem>>, %arg7: memref<1x128xf32, #tpu.memory_space<vmem>>, %arg8: memref<8x8x128xf32, #tpu.memory_space<vmem>>, %arg9: memref<8x128xf32, #tpu.memory_space<vmem>>) attributes {dimension_semantics = [#tpu.dimension_semantics<parallel>, #tpu.dimension_semantics<arbitrary>], iteration_bounds = array<i64: 1, 1>, scalar_prefetch = 0 : i64, scratch_operands = 1 : i64, tpu.core_type = #tpu.core_type<tc>, window_params = [{transform_indices = @transform_0, window_bounds = array<i64: 2>}, {transform_indices = @transform_1, window_bounds = array<i64: 8, 8, 8>}, {pipeline_mode = #tpu.pipeline_mode<synchronous>, transform_indices = @transform_2, window_bounds = array<i64: 8, 128>}, {pipeline_mode = #tpu.pipeline_mode<synchronous>, transform_indices = @transform_3, window_bounds = array<i64: 128, 128>}, {pipeline_mode = #tpu.pipeline_mode<synchronous>, transform_indices = @transform_4, window_bounds = array<i64: 1, 128>}, {pipeline_mode = #tpu.pipeline_mode<synchronous>, transform_indices = @transform_5, window_bounds = array<i64: 1, 128>}, {transform_indices = @transform_6, window_bounds = array<i64: 8, 8, 128>}]} {
    %c0_i32 = arith.constant 0 : i32
    %0 = arith.cmpi eq, %arg1, %c0_i32 : i32
    %1 = arith.extui %0 : i1 to i32
    %c0_i32_0 = arith.constant 0 : i32
    %2 = arith.cmpi ne, %1, %c0_i32_0 : i32
    scf.if %2 {
      %cst_68 = arith.constant 0.000000e+00 : f32
      %190 = vector.broadcast %cst_68 : f32 to vector<8x128xf32>
      %c0_69 = arith.constant 0 : index
      %c0_70 = arith.constant 0 : index
      %191 = vector.load %arg9[%c0_69, %c0_70] : memref<8x128xf32, #tpu.memory_space<vmem>>, vector<8x128xf32>
      tpu.vector_store %arg9[%c0_69, %c0_70], %190 {strides = array<i32>} : memref<8x128xf32, #tpu.memory_space<vmem>>, vector<8x128xf32>,
    } else {
    }
    %c0 = arith.constant 0 : index
    %c0_1 = arith.constant 0 : index
    %c0_2 = arith.constant 0 : index
    %3 = vector.load %arg3[%c0, %c0_1, %c0_2] : memref<8x8x8xf32, #tpu.memory_space<vmem>>, vector<8x8x8xf32>
    %4 = vector.shape_cast %3 : vector<8x8x8xf32> to vector<64x8xf32>
    %c0_3 = arith.constant 0 : index
    %c0_4 = arith.constant 0 : index
    %5 = vector.load %arg4[%c0_3, %c0_4] : memref<8x128xf32, #tpu.memory_space<vmem>>, vector<8x128xf32>
    %cst = arith.constant dense<0.000000e+00> : vector<64x128xf32>
    %6 = tpu.matmul %4, %5, %cst {dimension_numbers = #tpu.dot_dimension_numbers<[1], [0], [0], [1], [0, 0, 1, 1], [], []>} : vector<64x8xf32>, vector<8x128xf32>, vector<64x128xf32> -> vector<64x128xf32>
    %c0_5 = arith.constant 0 : index
    %c0_6 = arith.constant 0 : index
    %7 = vector.load %arg6[%c0_5, %c0_6] : memref<1x128xf32, #tpu.memory_space<vmem>>, vector<1x128xf32>
    %8 = vector.broadcast %7 : vector<1x128xf32> to vector<64x128xf32>
    %9 = arith.addf %6, %8 : vector<64x128xf32>
    %10 = vector.shape_cast %9 : vector<64x128xf32> to vector<8x8x128xf32>
    %c0_7 = arith.constant 0 : index
    %c0_8 = arith.constant 0 : index
    %c0_9 = arith.constant 0 : index
    %11 = vector.load %arg8[%c0_7, %c0_8, %c0_9] : memref<8x8x128xf32, #tpu.memory_space<vmem>>, vector<8x8x128xf32>
    tpu.vector_store %arg8[%c0_7, %c0_8, %c0_9], %10 {strides = array<i32>} : memref<8x8x128xf32, #tpu.memory_space<vmem>>, vector<8x8x128xf32>,
    %c0_10 = arith.constant 0 : index
    %c0_11 = arith.constant 0 : index
    %12 = vector.load %arg5[%c0_10, %c0_11] : memref<128x128xf32, #tpu.memory_space<vmem>>, vector<128x128xf32>
    %c0_12 = arith.constant 0 : index
    %c0_13 = arith.constant 0 : index
    %13 = vector.load %arg7[%c0_12, %c0_13] : memref<1x128xf32, #tpu.memory_space<vmem>>, vector<1x128xf32>
    %14 = vector.shape_cast %13 : vector<1x128xf32> to vector<1x128xf32>
    %15 = vector.broadcast %14 : vector<1x128xf32> to vector<8x128xf32>
    %c0_14 = arith.constant 0 : index
    %16 = memref.load %arg2[%c0_14] : memref<2xf32, #tpu.memory_space<smem>>
    %17 = vector.broadcast %16 : f32 to vector<8x128xf32>
    %c1 = arith.constant 1 : index
    %18 = memref.load %arg2[%c1] : memref<2xf32, #tpu.memory_space<smem>>
    %19 = vector.broadcast %18 : f32 to vector<8x128xf32>
    %c0_15 = arith.constant 0 : index
    %c0_16 = arith.constant 0 : index
    %20 = vector.load %arg9[%c0_15, %c0_16] : memref<8x128xf32, #tpu.memory_space<vmem>>, vector<8x128xf32>
    %c0_i32_17 = arith.constant 0 : i32
    %21 = arith.index_cast %c0_i32_17 : i32 to index
    %c0_18 = arith.constant 0 : index
    %c0_19 = arith.constant 0 : index
    %22 = vector.load %arg8[%21, %c0_18, %c0_19] : memref<8x8x128xf32, #tpu.memory_space<vmem>>, vector<1x8x128xf32>
    %23 = vector.shape_cast %22 : vector<1x8x128xf32> to vector<8x128xf32>
    %cst_20 = arith.constant dense<0.000000e+00> : vector<8x128xf32>
    %24 = tpu.matmul %20, %12, %cst_20 {dimension_numbers = #tpu.dot_dimension_numbers<[1], [0], [0], [1], [0, 0, 1, 1], [], []>} : vector<8x128xf32>, vector<128x128xf32>, vector<8x128xf32> -> vector<8x128xf32>
    %25 = arith.addf %23, %24 : vector<8x128xf32>
    %26 = arith.negf %25 : vector<8x128xf32>
    %27 = math.exp %26 : vector<8x128xf32>
    %cst_21 = arith.constant 1.000000e+00 : f32
    %28 = vector.broadcast %cst_21 : f32 to vector<8x128xf32>
    %29 = arith.addf %28, %27 : vector<8x128xf32>
    %30 = arith.divf %28, %29 : vector<8x128xf32>
    %31 = arith.addf %25, %15 : vector<8x128xf32>
    %32 = math.tanh %31 : vector<8x128xf32>
    %33 = arith.mulf %17, %32 : vector<8x128xf32>
    %34 = arith.subf %20, %33 : vector<8x128xf32>
    %35 = arith.mulf %30, %34 : vector<8x128xf32>
    %36 = arith.mulf %19, %32 : vector<8x128xf32>
    %37 = arith.addf %35, %36 : vector<8x128xf32>
    %38 = arith.index_cast %c0_i32_17 : i32 to index
    %c0_22 = arith.constant 0 : index
    %c0_23 = arith.constant 0 : index
    %39 = vector.load %arg8[%38, %c0_22, %c0_23] : memref<8x8x128xf32, #tpu.memory_space<vmem>>, vector<1x8x128xf32>
    %40 = vector.shape_cast %39 : vector<1x8x128xf32> to vector<8x128xf32>
    %41 = vector.shape_cast %37 : vector<8x128xf32> to vector<1x8x128xf32>
    tpu.vector_store %arg8[%38, %c0_22, %c0_23], %41 {strides = array<i32>} : memref<8x8x128xf32, #tpu.memory_space<vmem>>, vector<1x8x128xf32>,
    %c1_i32 = arith.constant 1 : i32
    %42 = arith.index_cast %c1_i32 : i32 to index
    %c0_24 = arith.constant 0 : index
    %c0_25 = arith.constant 0 : index
    %43 = vector.load %arg8[%42, %c0_24, %c0_25] : memref<8x8x128xf32, #tpu.memory_space<vmem>>, vector<1x8x128xf32>
    %44 = vector.shape_cast %43 : vector<1x8x128xf32> to vector<8x128xf32>
    %cst_26 = arith.constant dense<0.000000e+00> : vector<8x128xf32>
    %45 = tpu.matmul %37, %12, %cst_26 {dimension_numbers = #tpu.dot_dimension_numbers<[1], [0], [0], [1], [0, 0, 1, 1], [], []>} : vector<8x128xf32>, vector<128x128xf32>, vector<8x128xf32> -> vector<8x128xf32>
    %46 = arith.addf %44, %45 : vector<8x128xf32>
    %47 = arith.negf %46 : vector<8x128xf32>
    %48 = math.exp %47 : vector<8x128xf32>
    %cst_27 = arith.constant 1.000000e+00 : f32
    %49 = vector.broadcast %cst_27 : f32 to vector<8x128xf32>
    %50 = arith.addf %49, %48 : vector<8x128xf32>
    %51 = arith.divf %49, %50 : vector<8x128xf32>
    %52 = arith.addf %46, %15 : vector<8x128xf32>
    %53 = math.tanh %52 : vector<8x128xf32>
    %54 = arith.mulf %17, %53 : vector<8x128xf32>
    %55 = arith.subf %37, %54 : vector<8x128xf32>
    %56 = arith.mulf %51, %55 : vector<8x128xf32>
    %57 = arith.mulf %19, %53 : vector<8x128xf32>
    %58 = arith.addf %56, %57 : vector<8x128xf32>
    %59 = arith.index_cast %c1_i32 : i32 to index
    %c0_28 = arith.constant 0 : index
    %c0_29 = arith.constant 0 : index
    %60 = vector.load %arg8[%59, %c0_28, %c0_29] : memref<8x8x128xf32, #tpu.memory_space<vmem>>, vector<1x8x128xf32>
    %61 = vector.shape_cast %60 : vector<1x8x128xf32> to vector<8x128xf32>
    %62 = vector.shape_cast %58 : vector<8x128xf32> to vector<1x8x128xf32>
    tpu.vector_store %arg8[%59, %c0_28, %c0_29], %62 {strides = array<i32>} : memref<8x8x128xf32, #tpu.memory_space<vmem>>, vector<1x8x128xf32>,
    %c2_i32 = arith.constant 2 : i32
    %63 = arith.index_cast %c2_i32 : i32 to index
    %c0_30 = arith.constant 0 : index
    %c0_31 = arith.constant 0 : index
    %64 = vector.load %arg8[%63, %c0_30, %c0_31] : memref<8x8x128xf32, #tpu.memory_space<vmem>>, vector<1x8x128xf32>
    %65 = vector.shape_cast %64 : vector<1x8x128xf32> to vector<8x128xf32>
    %cst_32 = arith.constant dense<0.000000e+00> : vector<8x128xf32>
    %66 = tpu.matmul %58, %12, %cst_32 {dimension_numbers = #tpu.dot_dimension_numbers<[1], [0], [0], [1], [0, 0, 1, 1], [], []>} : vector<8x128xf32>, vector<128x128xf32>, vector<8x128xf32> -> vector<8x128xf32>
    %67 = arith.addf %65, %66 : vector<8x128xf32>
    %68 = arith.negf %67 : vector<8x128xf32>
    %69 = math.exp %68 : vector<8x128xf32>
    %cst_33 = arith.constant 1.000000e+00 : f32
    %70 = vector.broadcast %cst_33 : f32 to vector<8x128xf32>
    %71 = arith.addf %70, %69 : vector<8x128xf32>
    %72 = arith.divf %70, %71 : vector<8x128xf32>
    %73 = arith.addf %67, %15 : vector<8x128xf32>
    %74 = math.tanh %73 : vector<8x128xf32>
    %75 = arith.mulf %17, %74 : vector<8x128xf32>
    %76 = arith.subf %58, %75 : vector<8x128xf32>
    %77 = arith.mulf %72, %76 : vector<8x128xf32>
    %78 = arith.mulf %19, %74 : vector<8x128xf32>
    %79 = arith.addf %77, %78 : vector<8x128xf32>
    %80 = arith.index_cast %c2_i32 : i32 to index
    %c0_34 = arith.constant 0 : index
    %c0_35 = arith.constant 0 : index
    %81 = vector.load %arg8[%80, %c0_34, %c0_35] : memref<8x8x128xf32, #tpu.memory_space<vmem>>, vector<1x8x128xf32>
    %82 = vector.shape_cast %81 : vector<1x8x128xf32> to vector<8x128xf32>
    %83 = vector.shape_cast %79 : vector<8x128xf32> to vector<1x8x128xf32>
    tpu.vector_store %arg8[%80, %c0_34, %c0_35], %83 {strides = array<i32>} : memref<8x8x128xf32, #tpu.memory_space<vmem>>, vector<1x8x128xf32>,
    %c3_i32 = arith.constant 3 : i32
    %84 = arith.index_cast %c3_i32 : i32 to index
    %c0_36 = arith.constant 0 : index
    %c0_37 = arith.constant 0 : index
    %85 = vector.load %arg8[%84, %c0_36, %c0_37] : memref<8x8x128xf32, #tpu.memory_space<vmem>>, vector<1x8x128xf32>
    %86 = vector.shape_cast %85 : vector<1x8x128xf32> to vector<8x128xf32>
    %cst_38 = arith.constant dense<0.000000e+00> : vector<8x128xf32>
    %87 = tpu.matmul %79, %12, %cst_38 {dimension_numbers = #tpu.dot_dimension_numbers<[1], [0], [0], [1], [0, 0, 1, 1], [], []>} : vector<8x128xf32>, vector<128x128xf32>, vector<8x128xf32> -> vector<8x128xf32>
    %88 = arith.addf %86, %87 : vector<8x128xf32>
    %89 = arith.negf %88 : vector<8x128xf32>
    %90 = math.exp %89 : vector<8x128xf32>
    %cst_39 = arith.constant 1.000000e+00 : f32
    %91 = vector.broadcast %cst_39 : f32 to vector<8x128xf32>
    %92 = arith.addf %91, %90 : vector<8x128xf32>
    %93 = arith.divf %91, %92 : vector<8x128xf32>
    %94 = arith.addf %88, %15 : vector<8x128xf32>
    %95 = math.tanh %94 : vector<8x128xf32>
    %96 = arith.mulf %17, %95 : vector<8x128xf32>
    %97 = arith.subf %79, %96 : vector<8x128xf32>
    %98 = arith.mulf %93, %97 : vector<8x128xf32>
    %99 = arith.mulf %19, %95 : vector<8x128xf32>
    %100 = arith.addf %98, %99 : vector<8x128xf32>
    %101 = arith.index_cast %c3_i32 : i32 to index
    %c0_40 = arith.constant 0 : index
    %c0_41 = arith.constant 0 : index
    %102 = vector.load %arg8[%101, %c0_40, %c0_41] : memref<8x8x128xf32, #tpu.memory_space<vmem>>, vector<1x8x128xf32>
    %103 = vector.shape_cast %102 : vector<1x8x128xf32> to vector<8x128xf32>
    %104 = vector.shape_cast %100 : vector<8x128xf32> to vector<1x8x128xf32>
    tpu.vector_store %arg8[%101, %c0_40, %c0_41], %104 {strides = array<i32>} : memref<8x8x128xf32, #tpu.memory_space<vmem>>, vector<1x8x128xf32>,
    %c4_i32 = arith.constant 4 : i32
    %105 = arith.index_cast %c4_i32 : i32 to index
    %c0_42 = arith.constant 0 : index
    %c0_43 = arith.constant 0 : index
    %106 = vector.load %arg8[%105, %c0_42, %c0_43] : memref<8x8x128xf32, #tpu.memory_space<vmem>>, vector<1x8x128xf32>
    %107 = vector.shape_cast %106 : vector<1x8x128xf32> to vector<8x128xf32>
    %cst_44 = arith.constant dense<0.000000e+00> : vector<8x128xf32>
    %108 = tpu.matmul %100, %12, %cst_44 {dimension_numbers = #tpu.dot_dimension_numbers<[1], [0], [0], [1], [0, 0, 1, 1], [], []>} : vector<8x128xf32>, vector<128x128xf32>, vector<8x128xf32> -> vector<8x128xf32>
    %109 = arith.addf %107, %108 : vector<8x128xf32>
    %110 = arith.negf %109 : vector<8x128xf32>
    %111 = math.exp %110 : vector<8x128xf32>
    %cst_45 = arith.constant 1.000000e+00 : f32
    %112 = vector.broadcast %cst_45 : f32 to vector<8x128xf32>
    %113 = arith.addf %112, %111 : vector<8x128xf32>
    %114 = arith.divf %112, %113 : vector<8x128xf32>
    %115 = arith.addf %109, %15 : vector<8x128xf32>
    %116 = math.tanh %115 : vector<8x128xf32>
    %117 = arith.mulf %17, %116 : vector<8x128xf32>
    %118 = arith.subf %100, %117 : vector<8x128xf32>
    %119 = arith.mulf %114, %118 : vector<8x128xf32>
    %120 = arith.mulf %19, %116 : vector<8x128xf32>
    %121 = arith.addf %119, %120 : vector<8x128xf32>
    %122 = arith.index_cast %c4_i32 : i32 to index
    %c0_46 = arith.constant 0 : index
    %c0_47 = arith.constant 0 : index
    %123 = vector.load %arg8[%122, %c0_46, %c0_47] : memref<8x8x128xf32, #tpu.memory_space<vmem>>, vector<1x8x128xf32>
    %124 = vector.shape_cast %123 : vector<1x8x128xf32> to vector<8x128xf32>
    %125 = vector.shape_cast %121 : vector<8x128xf32> to vector<1x8x128xf32>
    tpu.vector_store %arg8[%122, %c0_46, %c0_47], %125 {strides = array<i32>} : memref<8x8x128xf32, #tpu.memory_space<vmem>>, vector<1x8x128xf32>,
    %c5_i32 = arith.constant 5 : i32
    %126 = arith.index_cast %c5_i32 : i32 to index
    %c0_48 = arith.constant 0 : index
    %c0_49 = arith.constant 0 : index
    %127 = vector.load %arg8[%126, %c0_48, %c0_49] : memref<8x8x128xf32, #tpu.memory_space<vmem>>, vector<1x8x128xf32>
    %128 = vector.shape_cast %127 : vector<1x8x128xf32> to vector<8x128xf32>
    %cst_50 = arith.constant dense<0.000000e+00> : vector<8x128xf32>
    %129 = tpu.matmul %121, %12, %cst_50 {dimension_numbers = #tpu.dot_dimension_numbers<[1], [0], [0], [1], [0, 0, 1, 1], [], []>} : vector<8x128xf32>, vector<128x128xf32>, vector<8x128xf32> -> vector<8x128xf32>
    %130 = arith.addf %128, %129 : vector<8x128xf32>
    %131 = arith.negf %130 : vector<8x128xf32>
    %132 = math.exp %131 : vector<8x128xf32>
    %cst_51 = arith.constant 1.000000e+00 : f32
    %133 = vector.broadcast %cst_51 : f32 to vector<8x128xf32>
    %134 = arith.addf %133, %132 : vector<8x128xf32>
    %135 = arith.divf %133, %134 : vector<8x128xf32>
    %136 = arith.addf %130, %15 : vector<8x128xf32>
    %137 = math.tanh %136 : vector<8x128xf32>
    %138 = arith.mulf %17, %137 : vector<8x128xf32>
    %139 = arith.subf %121, %138 : vector<8x128xf32>
    %140 = arith.mulf %135, %139 : vector<8x128xf32>
    %141 = arith.mulf %19, %137 : vector<8x128xf32>
    %142 = arith.addf %140, %141 : vector<8x128xf32>
    %143 = arith.index_cast %c5_i32 : i32 to index
    %c0_52 = arith.constant 0 : index
    %c0_53 = arith.constant 0 : index
    %144 = vector.load %arg8[%143, %c0_52, %c0_53] : memref<8x8x128xf32, #tpu.memory_space<vmem>>, vector<1x8x128xf32>
    %145 = vector.shape_cast %144 : vector<1x8x128xf32> to vector<8x128xf32>
    %146 = vector.shape_cast %142 : vector<8x128xf32> to vector<1x8x128xf32>
    tpu.vector_store %arg8[%143, %c0_52, %c0_53], %146 {strides = array<i32>} : memref<8x8x128xf32, #tpu.memory_space<vmem>>, vector<1x8x128xf32>,
    %c6_i32 = arith.constant 6 : i32
    %147 = arith.index_cast %c6_i32 : i32 to index
    %c0_54 = arith.constant 0 : index
    %c0_55 = arith.constant 0 : index
    %148 = vector.load %arg8[%147, %c0_54, %c0_55] : memref<8x8x128xf32, #tpu.memory_space<vmem>>, vector<1x8x128xf32>
    %149 = vector.shape_cast %148 : vector<1x8x128xf32> to vector<8x128xf32>
    %cst_56 = arith.constant dense<0.000000e+00> : vector<8x128xf32>
    %150 = tpu.matmul %142, %12, %cst_56 {dimension_numbers = #tpu.dot_dimension_numbers<[1], [0], [0], [1], [0, 0, 1, 1], [], []>} : vector<8x128xf32>, vector<128x128xf32>, vector<8x128xf32> -> vector<8x128xf32>
    %151 = arith.addf %149, %150 : vector<8x128xf32>
    %152 = arith.negf %151 : vector<8x128xf32>
    %153 = math.exp %152 : vector<8x128xf32>
    %cst_57 = arith.constant 1.000000e+00 : f32
    %154 = vector.broadcast %cst_57 : f32 to vector<8x128xf32>
    %155 = arith.addf %154, %153 : vector<8x128xf32>
    %156 = arith.divf %154, %155 : vector<8x128xf32>
    %157 = arith.addf %151, %15 : vector<8x128xf32>
    %158 = math.tanh %157 : vector<8x128xf32>
    %159 = arith.mulf %17, %158 : vector<8x128xf32>
    %160 = arith.subf %142, %159 : vector<8x128xf32>
    %161 = arith.mulf %156, %160 : vector<8x128xf32>
    %162 = arith.mulf %19, %158 : vector<8x128xf32>
    %163 = arith.addf %161, %162 : vector<8x128xf32>
    %164 = arith.index_cast %c6_i32 : i32 to index
    %c0_58 = arith.constant 0 : index
    %c0_59 = arith.constant 0 : index
    %165 = vector.load %arg8[%164, %c0_58, %c0_59] : memref<8x8x128xf32, #tpu.memory_space<vmem>>, vector<1x8x128xf32>
    %166 = vector.shape_cast %165 : vector<1x8x128xf32> to vector<8x128xf32>
    %167 = vector.shape_cast %163 : vector<8x128xf32> to vector<1x8x128xf32>
    tpu.vector_store %arg8[%164, %c0_58, %c0_59], %167 {strides = array<i32>} : memref<8x8x128xf32, #tpu.memory_space<vmem>>, vector<1x8x128xf32>,
    %c7_i32 = arith.constant 7 : i32
    %168 = arith.index_cast %c7_i32 : i32 to index
    %c0_60 = arith.constant 0 : index
    %c0_61 = arith.constant 0 : index
    %169 = vector.load %arg8[%168, %c0_60, %c0_61] : memref<8x8x128xf32, #tpu.memory_space<vmem>>, vector<1x8x128xf32>
    %170 = vector.shape_cast %169 : vector<1x8x128xf32> to vector<8x128xf32>
    %cst_62 = arith.constant dense<0.000000e+00> : vector<8x128xf32>
    %171 = tpu.matmul %163, %12, %cst_62 {dimension_numbers = #tpu.dot_dimension_numbers<[1], [0], [0], [1], [0, 0, 1, 1], [], []>} : vector<8x128xf32>, vector<128x128xf32>, vector<8x128xf32> -> vector<8x128xf32>
    %172 = arith.addf %170, %171 : vector<8x128xf32>
    %173 = arith.negf %172 : vector<8x128xf32>
    %174 = math.exp %173 : vector<8x128xf32>
    %cst_63 = arith.constant 1.000000e+00 : f32
    %175 = vector.broadcast %cst_63 : f32 to vector<8x128xf32>
    %176 = arith.addf %175, %174 : vector<8x128xf32>
    %177 = arith.divf %175, %176 : vector<8x128xf32>
    %178 = arith.addf %172, %15 : vector<8x128xf32>
    %179 = math.tanh %178 : vector<8x128xf32>
    %180 = arith.mulf %17, %179 : vector<8x128xf32>
    %181 = arith.subf %163, %180 : vector<8x128xf32>
    %182 = arith.mulf %177, %181 : vector<8x128xf32>
    %183 = arith.mulf %19, %179 : vector<8x128xf32>
    %184 = arith.addf %182, %183 : vector<8x128xf32>
    %185 = arith.index_cast %c7_i32 : i32 to index
    %c0_64 = arith.constant 0 : index
    %c0_65 = arith.constant 0 : index
    %186 = vector.load %arg8[%185, %c0_64, %c0_65] : memref<8x8x128xf32, #tpu.memory_space<vmem>>, vector<1x8x128xf32>
    %187 = vector.shape_cast %186 : vector<1x8x128xf32> to vector<8x128xf32>
    %188 = vector.shape_cast %184 : vector<8x128xf32> to vector<1x8x128xf32>
    tpu.vector_store %arg8[%185, %c0_64, %c0_65], %188 {strides = array<i32>} : memref<8x8x128xf32, #tpu.memory_space<vmem>>, vector<1x8x128xf32>,
    %c8_i32 = arith.constant 8 : i32
    %c0_66 = arith.constant 0 : index
    %c0_67 = arith.constant 0 : index
    %189 = vector.load %arg9[%c0_66, %c0_67] : memref<8x128xf32, #tpu.memory_space<vmem>>, vector<8x128xf32>
    tpu.vector_store %arg9[%c0_66, %c0_67], %184 {strides = array<i32>} : memref<8x128xf32, #tpu.memory_space<vmem>>, vector<8x128xf32>,
    return
  }
  func.func @transform_0(%arg0: i32, %arg1: i32) -> i32 {
    %c0_i32 = arith.constant 0 : i32
    %c0_i32_0 = arith.constant 0 : i32
    return %c0_i32 : i32
  }
  func.func @transform_1(%arg0: i32, %arg1: i32) -> (i32, i32, i32) {
    %c0_i32 = arith.constant 0 : i32
    %c0_i32_0 = arith.constant 0 : i32
    return %arg1, %arg0, %c0_i32 : i32, i32, i32
  }
  func.func @transform_2(%arg0: i32, %arg1: i32) -> (i32, i32) {
    %c0_i32 = arith.constant 0 : i32
    %c0_i32_0 = arith.constant 0 : i32
    %c0_i32_1 = arith.constant 0 : i32
    return %c0_i32, %c0_i32_0 : i32, i32
  }
  func.func @transform_3(%arg0: i32, %arg1: i32) -> (i32, i32) {
    %c0_i32 = arith.constant 0 : i32
    %c0_i32_0 = arith.constant 0 : i32
    %c0_i32_1 = arith.constant 0 : i32
    return %c0_i32, %c0_i32_0 : i32, i32
  }
  func.func @transform_4(%arg0: i32, %arg1: i32) -> (i32, i32) {
    %c0_i32 = arith.constant 0 : i32
    %c0_i32_0 = arith.constant 0 : i32
    %c0_i32_1 = arith.constant 0 : i32
    return %c0_i32, %c0_i32_0 : i32, i32
  }
  func.func @transform_5(%arg0: i32, %arg1: i32) -> (i32, i32) {
    %c0_i32 = arith.constant 0 : i32
    %c0_i32_0 = arith.constant 0 : i32
    %c0_i32_1 = arith.constant 0 : i32
    return %c0_i32, %c0_i32_0 : i32, i32
  }
  func.func @transform_6(%arg0: i32, %arg1: i32) -> (i32, i32, i32) {
    %c0_i32 = arith.constant 0 : i32
    %c0_i32_0 = arith.constant 0 : i32
    return %arg1, %arg0, %c0_i32 : i32, i32, i32
  }
}

</mosaic_0001>

<llo_original>
// kernel: tpu_custom_call.1
$region0: #{tpu_custom_call.1}
  #allocation0 [shape = 'u32[]', space=smem, size = 0x4, offset = 0x4, fixed_abs, tag = 'smem constant byte address 0x4 - core index']
  #allocation1 [shape = 'u32[72,128]{1,0:T(1,128)}', space=vmem, size = 0x9000, scoped, tag = 'internal scratch']
  #allocation2 [shape = 'f32[8,128]{1,0:T(8,128)}', space=vmem, size = 0x1000, scoped, tag = 'scratch operand']
  %s0 = inlined_call_operand.hbm [shape: f32[2], index: 0, kind: input, shape index: {}]
  %s1 = inlined_call_operand.hbm [shape: f32[8,8,8], index: 1, kind: input, shape index: {}]
  %s2 = inlined_call_operand.hbm [shape: f32[8,128], index: 2, kind: input, shape index: {}]
  %s3 = inlined_call_operand.hbm [shape: f32[128,128], index: 3, kind: input, shape index: {}]
  %s4 = inlined_call_operand.vmem [shape: f32[1,128], index: 4, kind: input, shape index: {}]
  %s5 = inlined_call_operand.vmem [shape: f32[1,128], index: 5, kind: input, shape index: {}]
  %s6 = inlined_call_operand.hbm [shape: f32[8,8,128], index: 6, kind: output, shape index: {}]
  %s7 = sld [smem:[#allocation0]]
  $region54: #{tpu_custom_call.1} parent=0
    _
  %s9 = ssub.s32 1, %s7
  %s10 = scalar_select 0, %s9, %s7
  $region1: #{tpu_custom_call.1} parent=0
    #allocation3 [shape = 'u8[512]{0}', space=smem, size = 0x200, scoped, tag = 'input window, operand 0, single buffered']
    #allocation4 [shape = 's32[1]{0}', space=sflag, size = 0x4, scoped, tag = 'scoped memory for tpu_custom_call.1']
    #allocation5 [shape = 's32[1]{0}', space=sflag, size = 0x4, scoped, tag = 'scoped memory for tpu_custom_call.1']
    #allocation6 [shape = 's32[1]{0}', space=sflag, size = 0x4, scoped, tag = 'scoped memory for tpu_custom_call.1']
    #allocation7 [shape = 'u8[32768]{0}', space=vmem, size = 0x8000, scoped, tag = 'input window, operand 1, single buffered']
    #allocation8 [shape = 'u8[4096]{0}', space=vmem, size = 0x1000, scoped, tag = 'input window, operand 2, single buffered']
    #allocation9 [shape = 's32[1]{0}', space=sflag, size = 0x4, scoped, tag = 'scoped memory for tpu_custom_call.1']
    #allocation10 [shape = 'u8[65536]{0}', space=vmem, size = 0x10000, scoped, tag = 'input window, operand 3, single buffered']
    #allocation11 [shape = 'u8[32768]{0}', space=vmem, size = 0x8000, scoped, tag = 'output window, operand 0, single buffered']
    %11 = vsyncpa [#allocation6], 0
    %12 = vsyncpa [#allocation4], 0
    %13 = vsyncpa [#allocation9], 0
    %14 = vsyncpa [#allocation5], 0
    // Predicated region
    $region2: #{tpu_custom_call.1} parent=1 // pred_check
      _
    $region3: #{tpu_custom_call.1} parent=1 // pred_check_branch
      %16 = sbr.rel (0) target = $region5
    $region4: #{tpu_custom_call.1} parent=1 // pred_region
      %18 = vsyncadd [#allocation6], 0
      %s20 = sshll.u32 %s0, 4
      %s21 = int_to_ptr.hbm [resolvable:$true] %s20
      %23 = dma.hbm_to_smem %s21, 16, [#allocation3], [#allocation6]
    $region5: #{tpu_custom_call.1} parent=1 // pred_fallthru
      _
    // Predicated region
    $region6: #{tpu_custom_call.1} parent=1 // pred_check
      _
    $region7: #{tpu_custom_call.1} parent=1 // pred_check_branch
      %25 = sbr.rel (0) target = $region9
    $region8: #{tpu_custom_call.1} parent=1 // pred_region
      %27 = vsyncadd [#allocation4], 0
      %s28 = sshll.u32 %s1, 4
      %s29 = int_to_ptr.hbm [resolvable:$true] %s28
      %s30 = sshll.u32 [#allocation7], 4
      %s31 = int_to_ptr.vmem [resolvable:$true] %s30
      %36 = dma.hbm_to_vmem [thread:$0]  %s29, 1024, %s31, [#allocation4], 128, 128, 8
    $region9: #{tpu_custom_call.1} parent=1 // pred_fallthru
      _
    // Predicated region
    $region10: #{tpu_custom_call.1} parent=1 // pred_check
      _
    $region11: #{tpu_custom_call.1} parent=1 // pred_check_branch
      %38 = sbr.rel (0) target = $region13
    $region12: #{tpu_custom_call.1} parent=1 // pred_region
      %40 = vsyncadd [#allocation9], 0
      %s42 = sshll.u32 %s2, 4
      %s43 = int_to_ptr.hbm [resolvable:$true] %s42
      %s44 = sshll.u32 [#allocation8], 4
      %s45 = int_to_ptr.vmem [resolvable:$true] %s44
      %47 = dma.hbm_to_vmem [thread:$0]  %s43, 128, %s45, [#allocation9]
    $region13: #{tpu_custom_call.1} parent=1 // pred_fallthru
      _
    // Predicated region
    $region14: #{tpu_custom_call.1} parent=1 // pred_check
      _
    $region15: #{tpu_custom_call.1} parent=1 // pred_check_branch
      %49 = sbr.rel (0) target = $region17
    $region16: #{tpu_custom_call.1} parent=1 // pred_region
      %51 = vsyncadd [#allocation9], 0
      %s52 = sshll.u32 %s3, 4
      %s53 = int_to_ptr.hbm [resolvable:$true] %s52
      %s54 = sshll.u32 [#allocation10], 4
      %s55 = int_to_ptr.vmem [resolvable:$true] %s54
      %60 = dma.hbm_to_vmem [thread:$0]  %s53, 2048, %s55, [#allocation9], 128, 128, 8
    $region17: #{tpu_custom_call.1} parent=1 // pred_fallthru
      _
    // Predicated region
    $region18: #{tpu_custom_call.1} parent=1 // pred_check
      _
    $region19: #{tpu_custom_call.1} parent=1 // pred_check_branch
      %62 = sbr.rel (0) target = $region21
    $region20: #{tpu_custom_call.1} parent=1 // pred_region
      _
    $region21: #{tpu_custom_call.1} parent=1 // pred_fallthru
      _
    // Predicated region
    $region22: #{tpu_custom_call.1} parent=1 // pred_check
      _
    $region23: #{tpu_custom_call.1} parent=1 // pred_check_branch
      %64 = sbr.rel (0) target = $region25
    $region24: #{tpu_custom_call.1} parent=1 // pred_region
      _
    $region25: #{tpu_custom_call.1} parent=1 // pred_fallthru
      _
    // Predicated region
    $region26: #{tpu_custom_call.1} parent=1 // pred_check
      _
    $region27: #{tpu_custom_call.1} parent=1 // pred_check_branch
      %66 = sbr.rel (0) target = $region29
    $region28: #{tpu_custom_call.1} parent=1 // pred_region
      %68 = dma.done [#allocation6], 16
    $region29: #{tpu_custom_call.1} parent=1 // pred_fallthru
      _
    // Predicated region
    $region30: #{tpu_custom_call.1} parent=1 // pred_check
      _
    $region31: #{tpu_custom_call.1} parent=1 // pred_check_branch
      %70 = sbr.rel (0) target = $region33
    $region32: #{tpu_custom_call.1} parent=1 // pred_region
      %72 = dma.done [#allocation4], 1024
    $region33: #{tpu_custom_call.1} parent=1 // pred_fallthru
      _
    // Predicated region
    $region34: #{tpu_custom_call.1} parent=1 // pred_check
      _
    $region35: #{tpu_custom_call.1} parent=1 // pred_check_branch
      %74 = sbr.rel (0) target = $region37
    $region36: #{tpu_custom_call.1} parent=1 // pred_region
      %76 = dma.done [#allocation9], 128
    $region37: #{tpu_custom_call.1} parent=1 // pred_fallthru
      _
    // Predicated region
    $region38: #{tpu_custom_call.1} parent=1 // pred_check
      _
    $region39: #{tpu_custom_call.1} parent=1 // pred_check_branch
      %78 = sbr.rel (0) target = $region41
    $region40: #{tpu_custom_call.1} parent=1 // pred_region
      %80 = dma.done [#allocation9], 2048
    $region41: #{tpu_custom_call.1} parent=1 // pred_fallthru
      _
    %81 = sfence
    %p82 = scmp.eq.s32.totalorder 0, 0
    // Predicated region
    $region42: #{tpu_custom_call.1} parent=1 // pred_check
      %p83 = pneg %p82
    $region43: #{tpu_custom_call.1} parent=1 // pred_check_branch
      %85 = sbr.rel (%p83) target = $region45
    $region44: #{tpu_custom_call.1} parent=1 // pred_region
      %86 = vst [vmem:[#allocation2] sm:$0xff] 0.0
    $region45: #{tpu_custom_call.1} parent=1 // pred_fallthru
      _
    %v87 = vld [vmem:[#allocation7] sm:$0xff]
    %v88 = vld [vmem:[#allocation7 + $0x8] sm:$0xff]
    %v89 = vld [vmem:[#allocation7 + $0x10] sm:$0xff]
    %v90 = vld [vmem:[#allocation7 + $0x18] sm:$0xff]
    %v91 = vld [vmem:[#allocation7 + $0x20] sm:$0xff]
    %v92 = vld [vmem:[#allocation7 + $0x28] sm:$0xff]
    %v93 = vld [vmem:[#allocation7 + $0x30] sm:$0xff]
    %v94 = vld [vmem:[#allocation7 + $0x38] sm:$0xff]
    %v95 = vld [vmem:[#allocation8] sm:$0xff]
    %v96 = vld [vmem:[%s4] sm:$0x1]
    %v98 = vperm.slane %v96, 0
    %vm100 = vcmask 64512
    %v102 = vsel %vm100, %v87, 0
    %v105 = vsel %vm100, %v88, 0
    %v108 = vsel %vm100, %v89, 0
    %v111 = vsel %vm100, %v90, 0
    %v114 = vsel %vm100, %v91, 0
    %v117 = vsel %vm100, %v92, 0
    %v120 = vsel %vm100, %v93, 0
    %v123 = vsel %vm100, %v94, 0
    %125 = vmatpush.msra.mxu0 0.0
    %126 = vmatpush.msra.mxu0 0.0
    %127 = vmatpush.msra.mxu0 0.0
    %128 = vmatpush.msra.mxu0 0.0
    %129 = vmatpush.msra.mxu0 0.0
    %130 = vmatpush.msra.mxu0 0.0
    %131 = vmatpush.msra.mxu0 0.0
    %132 = vmatpush.msra.mxu0 0.0
    %133 = vmatpush.msra.mxu0 0.0
    %134 = vmatpush.msra.mxu0 0.0
    %135 = vmatpush.msra.mxu0 0.0
    %136 = vmatpush.msra.mxu0 0.0
    %137 = vmatpush.msra.mxu0 0.0
    %138 = vmatpush.msra.mxu0 0.0
    %139 = vmatpush.msra.mxu0 0.0
    %140 = vmatpush.msra.mxu0 %v95
    %141 = vmatmul.f32.gmra.mxu0 %v102
    %v142 = vpop.f32.mrf.mxu0
    %v143 = vadd.f32 %v98, %v142
    %144 = vmatmul.f32.gmra.mxu0 %v105
    %v145 = vpop.f32.mrf.mxu0
    %v146 = vadd.f32 %v98, %v145
    %147 = vmatmul.f32.gmra.mxu0 %v108
    %v148 = vpop.f32.mrf.mxu0
    %v149 = vadd.f32 %v98, %v148
    %150 = vmatmul.f32.gmra.mxu0 %v111
    %v151 = vpop.f32.mrf.mxu0
    %v152 = vadd.f32 %v98, %v151
    %153 = vmatmul.f32.gmra.mxu0 %v114
    %v154 = vpop.f32.mrf.mxu0
    %v155 = vadd.f32 %v98, %v154
    %156 = vmatmul.f32.gmra.mxu0 %v117
    %v157 = vpop.f32.mrf.mxu0
    %v158 = vadd.f32 %v98, %v157
    %159 = vmatmul.f32.gmra.mxu0 %v120
    %v160 = vpop.f32.mrf.mxu0
    %v161 = vadd.f32 %v98, %v160
    %162 = vmatmul.f32.gmra.mxu0 %v123
    %v163 = vpop.f32.mrf.mxu0
    %v164 = vadd.f32 %v98, %v163
    %165 = vdwg.mxu0
    %166 = vst [vmem:[#allocation11] sm:$0xff] %v143
    %167 = vst [vmem:[#allocation11 + $0x8] sm:$0xff] %v146
    %168 = vst [vmem:[#allocation11 + $0x10] sm:$0xff] %v149
    %169 = vst [vmem:[#allocation11 + $0x18] sm:$0xff] %v152
    %170 = vst [vmem:[#allocation11 + $0x20] sm:$0xff] %v155
    %171 = vst [vmem:[#allocation11 + $0x28] sm:$0xff] %v158
    %172 = vst [vmem:[#allocation11 + $0x30] sm:$0xff] %v161
    %173 = vst [vmem:[#allocation11 + $0x38] sm:$0xff] %v164
    %v174 = vld [vmem:[#allocation10] sm:$0xff]
    %v175 = vld [vmem:[#allocation10 + $0x8] sm:$0xff]
    %v176 = vld [vmem:[#allocation10 + $0x10] sm:$0xff]
    %v177 = vld [vmem:[#allocation10 + $0x18] sm:$0xff]
    %v178 = vld [vmem:[#allocation10 + $0x20] sm:$0xff]
    %v179 = vld [vmem:[#allocation10 + $0x28] sm:$0xff]
    %v180 = vld [vmem:[#allocation10 + $0x30] sm:$0xff]
    %v181 = vld [vmem:[#allocation10 + $0x38] sm:$0xff]
    %v182 = vld [vmem:[#allocation10 + $0x40] sm:$0xff]
    %v183 = vld [vmem:[#allocation10 + $0x48] sm:$0xff]
    %v184 = vld [vmem:[#allocation10 + $0x50] sm:$0xff]
    %v185 = vld [vmem:[#allocation10 + $0x58] sm:$0xff]
    %v186 = vld [vmem:[#allocation10 + $0x60] sm:$0xff]
    %v187 = vld [vmem:[#allocation10 + $0x68] sm:$0xff]
    %v188 = vld [vmem:[#allocation10 + $0x70] sm:$0xff]
    %v189 = vld [vmem:[#allocation10 + $0x78] sm:$0xff]
    %v190 = vld [vmem:[%s5] sm:$0x1]
    %v192 = vperm.slane %v190, 0
    %s194 = sld [smem:[#allocation3]]
    %v195 = vstv %s194
    %s196 = sld [smem:[#allocation3 + $0x1]]
    %v197 = vstv %s196
    %v198 = vld [vmem:[#allocation2] sm:$0xff]
    %v199 = vld [vmem:[#allocation11] sm:$0xff]
    %200 = vmatpush.msra.mxu0 %v189
    %201 = vmatpush.msra.mxu0 %v188
    %202 = vmatpush.msra.mxu0 %v187
    %203 = vmatpush.msra.mxu0 %v186
    %204 = vmatpush.msra.mxu0 %v185
    %205 = vmatpush.msra.mxu0 %v184
    %206 = vmatpush.msra.mxu0 %v183
    %207 = vmatpush.msra.mxu0 %v182
    %208 = vmatpush.msra.mxu0 %v181
    %209 = vmatpush.msra.mxu0 %v180
    %210 = vmatpush.msra.mxu0 %v179
    %211 = vmatpush.msra.mxu0 %v178
    %212 = vmatpush.msra.mxu0 %v177
    %213 = vmatpush.msra.mxu0 %v176
    %214 = vmatpush.msra.mxu0 %v175
    %215 = vmatpush.msra.mxu0 %v174
    %216 = vmatmul.f32.gmra.mxu0 %v198
    %v217 = vpop.f32.mrf.mxu0
    %v218 = vadd.f32 0.0, %v217
    %219 = vdwg.mxu0
    %v220 = vadd.f32 %v199, %v218
    %v221 = vxor.u32 %v220, 2147483648
    %v222 = vmul.f32 %v221, 1.442695
    %v223 = vpow.pop %v222
    %v224 = vadd.f32 %v223, 1.0
    %v225 = vrcp.pop %v224
    %v226 = vmul.f32 %v224, %v225
    %v227 = vsub.f32 1.0, %v226
    %v228 = vmul.f32 %v225, %v227
    %v229 = vadd.f32 %v225, %v228
    %vm230 = vweird.f32 %v224
    %vm231 = vweird.f32 %v225
    %vm232 = vmor %vm230, %vm231
    %v233 = vsel %vm232, %v225, %v229
    %v234 = vand.u32 2147483647, %v224
    %vm235 = vcmp.eq.f32.partialorder %v234, 8.507059e+37
    %v236 = vand.u32 %v224, 2147483648
    %v237 = vor.u32 1.1754944e-38, %v236
    %v238 = vsel %vm235, %v237, %v233
    %v239 = vmul.f32 1.0, %v238
    %v240 = vadd.f32 %v220, %v192
    %v241 = vtanh.pop %v240
    %v242 = vmul.f32 %v195, %v241
    %v243 = vsub.f32 %v198, %v242
    %v244 = vmul.f32 %v239, %v243
    %v245 = vmul.f32 %v197, %v241
    %v246 = vadd.f32 %v244, %v245
    %247 = vst [vmem:[#allocation11] sm:$0xff] %v246
    %s248 = scalar_lea.vmem [#allocation11], 8
    %v249 = vld [vmem:[%s248] sm:$0xff]
    %250 = vmatpush.msra.mxu0 %v189
    %251 = vmatpush.msra.mxu0 %v188
    %252 = vmatpush.msra.mxu0 %v187
    %253 = vmatpush.msra.mxu0 %v186
    %254 = vmatpush.msra.mxu0 %v185
    %255 = vmatpush.msra.mxu0 %v184
    %256 = vmatpush.msra.mxu0 %v183
    %257 = vmatpush.msra.mxu0 %v182
    %258 = vmatpush.msra.mxu0 %v181
    %259 = vmatpush.msra.mxu0 %v180
    %260 = vmatpush.msra.mxu0 %v179
    %261 = vmatpush.msra.mxu0 %v178
    %262 = vmatpush.msra.mxu0 %v177
    %263 = vmatpush.msra.mxu0 %v176
    %264 = vmatpush.msra.mxu0 %v175
    %265 = vmatpush.msra.mxu0 %v174
    %266 = vmatmul.f32.gmra.mxu0 %v246
    %v267 = vpop.f32.mrf.mxu0
    %v268 = vadd.f32 0.0, %v267
    %269 = vdwg.mxu0
    %v270 = vadd.f32 %v249, %v268
    %v271 = vxor.u32 %v270, 2147483648
    %v272 = vmul.f32 %v271, 1.442695
    %v273 = vpow.pop %v272
    %v274 = vadd.f32 %v273, 1.0
    %v275 = vrcp.pop %v274
    %v276 = vmul.f32 %v274, %v275
    %v277 = vsub.f32 1.0, %v276
    %v278 = vmul.f32 %v275, %v277
    %v279 = vadd.f32 %v275, %v278
    %vm280 = vweird.f32 %v274
    %vm281 = vweird.f32 %v275
    %vm282 = vmor %vm280, %vm281
    %v283 = vsel %vm282, %v275, %v279
    %v284 = vand.u32 2147483647, %v274
    %vm285 = vcmp.eq.f32.partialorder %v284, 8.507059e+37
    %v286 = vand.u32 %v274, 2147483648
    %v287 = vor.u32 1.1754944e-38, %v286
    %v288 = vsel %vm285, %v287, %v283
    %v289 = vmul.f32 1.0, %v288
    %v290 = vadd.f32 %v270, %v192
    %v291 = vtanh.pop %v290
    %v292 = vmul.f32 %v195, %v291
    %v293 = vsub.f32 %v246, %v292
    %v294 = vmul.f32 %v289, %v293
    %v295 = vmul.f32 %v197, %v291
    %v296 = vadd.f32 %v294, %v295
    %297 = vst [vmem:[%s248] sm:$0xff] %v296
    %s298 = scalar_lea.vmem [#allocation11], 16
    %v299 = vld [vmem:[%s298] sm:$0xff]
    %300 = vmatpush.msra.mxu0 %v189
    %301 = vmatpush.msra.mxu0 %v188
    %302 = vmatpush.msra.mxu0 %v187
    %303 = vmatpush.msra.mxu0 %v186
    %304 = vmatpush.msra.mxu0 %v185
    %305 = vmatpush.msra.mxu0 %v184
    %306 = vmatpush.msra.mxu0 %v183
    %307 = vmatpush.msra.mxu0 %v182
    %308 = vmatpush.msra.mxu0 %v181
    %309 = vmatpush.msra.mxu0 %v180
    %310 = vmatpush.msra.mxu0 %v179
    %311 = vmatpush.msra.mxu0 %v178
    %312 = vmatpush.msra.mxu0 %v177
    %313 = vmatpush.msra.mxu0 %v176
    %314 = vmatpush.msra.mxu0 %v175
    %315 = vmatpush.msra.mxu0 %v174
    %316 = vmatmul.f32.gmra.mxu0 %v296
    %v317 = vpop.f32.mrf.mxu0
    %v318 = vadd.f32 0.0, %v317
    %319 = vdwg.mxu0
    %v320 = vadd.f32 %v299, %v318
    %v321 = vxor.u32 %v320, 2147483648
    %v322 = vmul.f32 %v321, 1.442695
    %v323 = vpow.pop %v322
    %v324 = vadd.f32 %v323, 1.0
    %v325 = vrcp.pop %v324
    %v326 = vmul.f32 %v324, %v325
    %v327 = vsub.f32 1.0, %v326
    %v328 = vmul.f32 %v325, %v327
    %v329 = vadd.f32 %v325, %v328
    %vm330 = vweird.f32 %v324
    %vm331 = vweird.f32 %v325
    %vm332 = vmor %vm330, %vm331
    %v333 = vsel %vm332, %v325, %v329
    %v334 = vand.u32 2147483647, %v324
    %vm335 = vcmp.eq.f32.partialorder %v334, 8.507059e+37
    %v336 = vand.u32 %v324, 2147483648
    %v337 = vor.u32 1.1754944e-38, %v336
    %v338 = vsel %vm335, %v337, %v333
    %v339 = vmul.f32 1.0, %v338
    %v340 = vadd.f32 %v320, %v192
    %v341 = vtanh.pop %v340
    %v342 = vmul.f32 %v195, %v341
    %v343 = vsub.f32 %v296, %v342
    %v344 = vmul.f32 %v339, %v343
    %v345 = vmul.f32 %v197, %v341
    %v346 = vadd.f32 %v344, %v345
    %347 = vst [vmem:[%s298] sm:$0xff] %v346
    %s348 = scalar_lea.vmem [#allocation11], 24
    %v349 = vld [vmem:[%s348] sm:$0xff]
    %350 = vmatpush.msra.mxu0 %v189
    %351 = vmatpush.msra.mxu0 %v188
    %352 = vmatpush.msra.mxu0 %v187
    %353 = vmatpush.msra.mxu0 %v186
    %354 = vmatpush.msra.mxu0 %v185
    %355 = vmatpush.msra.mxu0 %v184
    %356 = vmatpush.msra.mxu0 %v183
    %357 = vmatpush.msra.mxu0 %v182
    %358 = vmatpush.msra.mxu0 %v181
    %359 = vmatpush.msra.mxu0 %v180
    %360 = vmatpush.msra.mxu0 %v179
    %361 = vmatpush.msra.mxu0 %v178
    %362 = vmatpush.msra.mxu0 %v177
    %363 = vmatpush.msra.mxu0 %v176
    %364 = vmatpush.msra.mxu0 %v175
    %365 = vmatpush.msra.mxu0 %v174
    %366 = vmatmul.f32.gmra.mxu0 %v346
    %v367 = vpop.f32.mrf.mxu0
    %v368 = vadd.f32 0.0, %v367
    %369 = vdwg.mxu0
    %v370 = vadd.f32 %v349, %v368
    %v371 = vxor.u32 %v370, 2147483648
    %v372 = vmul.f32 %v371, 1.442695
    %v373 = vpow.pop %v372
    %v374 = vadd.f32 %v373, 1.0
    %v375 = vrcp.pop %v374
    %v376 = vmul.f32 %v374, %v375
    %v377 = vsub.f32 1.0, %v376
    %v378 = vmul.f32 %v375, %v377
    %v379 = vadd.f32 %v375, %v378
    %vm380 = vweird.f32 %v374
    %vm381 = vweird.f32 %v375
    %vm382 = vmor %vm380, %vm381
    %v383 = vsel %vm382, %v375, %v379
    %v384 = vand.u32 2147483647, %v374
    %vm385 = vcmp.eq.f32.partialorder %v384, 8.507059e+37
    %v386 = vand.u32 %v374, 2147483648
    %v387 = vor.u32 1.1754944e-38, %v386
    %v388 = vsel %vm385, %v387, %v383
    %v389 = vmul.f32 1.0, %v388
    %v390 = vadd.f32 %v370, %v192
    %v391 = vtanh.pop %v390
    %v392 = vmul.f32 %v195, %v391
    %v393 = vsub.f32 %v346, %v392
    %v394 = vmul.f32 %v389, %v393
    %v395 = vmul.f32 %v197, %v391
    %v396 = vadd.f32 %v394, %v395
    %397 = vst [vmem:[%s348] sm:$0xff] %v396
    %s398 = scalar_lea.vmem [#allocation11], 32
    %v399 = vld [vmem:[%s398] sm:$0xff]
    %400 = vmatpush.msra.mxu0 %v189
    %401 = vmatpush.msra.mxu0 %v188
    %402 = vmatpush.msra.mxu0 %v187
    %403 = vmatpush.msra.mxu0 %v186
    %404 = vmatpush.msra.mxu0 %v185
    %405 = vmatpush.msra.mxu0 %v184
    %406 = vmatpush.msra.mxu0 %v183
    %407 = vmatpush.msra.mxu0 %v182
    %408 = vmatpush.msra.mxu0 %v181
    %409 = vmatpush.msra.mxu0 %v180
    %410 = vmatpush.msra.mxu0 %v179
    %411 = vmatpush.msra.mxu0 %v178
    %412 = vmatpush.msra.mxu0 %v177
    %413 = vmatpush.msra.mxu0 %v176
    %414 = vmatpush.msra.mxu0 %v175
    %415 = vmatpush.msra.mxu0 %v174
    %416 = vmatmul.f32.gmra.mxu0 %v396
    %v417 = vpop.f32.mrf.mxu0
    %v418 = vadd.f32 0.0, %v417
    %419 = vdwg.mxu0
    %v420 = vadd.f32 %v399, %v418
    %v421 = vxor.u32 %v420, 2147483648
    %v422 = vmul.f32 %v421, 1.442695
    %v423 = vpow.pop %v422
    %v424 = vadd.f32 %v423, 1.0
    %v425 = vrcp.pop %v424
    %v426 = vmul.f32 %v424, %v425
    %v427 = vsub.f32 1.0, %v426
    %v428 = vmul.f32 %v425, %v427
    %v429 = vadd.f32 %v425, %v428
    %vm430 = vweird.f32 %v424
    %vm431 = vweird.f32 %v425
    %vm432 = vmor %vm430, %vm431
    %v433 = vsel %vm432, %v425, %v429
    %v434 = vand.u32 2147483647, %v424
    %vm435 = vcmp.eq.f32.partialorder %v434, 8.507059e+37
    %v436 = vand.u32 %v424, 2147483648
    %v437 = vor.u32 1.1754944e-38, %v436
    %v438 = vsel %vm435, %v437, %v433
    %v439 = vmul.f32 1.0, %v438
    %v440 = vadd.f32 %v420, %v192
    %v441 = vtanh.pop %v440
    %v442 = vmul.f32 %v195, %v441
    %v443 = vsub.f32 %v396, %v442
    %v444 = vmul.f32 %v439, %v443
    %v445 = vmul.f32 %v197, %v441
    %v446 = vadd.f32 %v444, %v445
    %447 = vst [vmem:[%s398] sm:$0xff] %v446
    %s448 = scalar_lea.vmem [#allocation11], 40
    %v449 = vld [vmem:[%s448] sm:$0xff]
    %450 = vmatpush.msra.mxu0 %v189
    %451 = vmatpush.msra.mxu0 %v188
    %452 = vmatpush.msra.mxu0 %v187
    %453 = vmatpush.msra.mxu0 %v186
    %454 = vmatpush.msra.mxu0 %v185
    %455 = vmatpush.msra.mxu0 %v184
    %456 = vmatpush.msra.mxu0 %v183
    %457 = vmatpush.msra.mxu0 %v182
    %458 = vmatpush.msra.mxu0 %v181
    %459 = vmatpush.msra.mxu0 %v180
    %460 = vmatpush.msra.mxu0 %v179
    %461 = vmatpush.msra.mxu0 %v178
    %462 = vmatpush.msra.mxu0 %v177
    %463 = vmatpush.msra.mxu0 %v176
    %464 = vmatpush.msra.mxu0 %v175
    %465 = vmatpush.msra.mxu0 %v174
    %466 = vmatmul.f32.gmra.mxu0 %v446
    %v467 = vpop.f32.mrf.mxu0
    %v468 = vadd.f32 0.0, %v467
    %469 = vdwg.mxu0
    %v470 = vadd.f32 %v449, %v468
    %v471 = vxor.u32 %v470, 2147483648
    %v472 = vmul.f32 %v471, 1.442695
    %v473 = vpow.pop %v472
    %v474 = vadd.f32 %v473, 1.0
    %v475 = vrcp.pop %v474
    %v476 = vmul.f32 %v474, %v475
    %v477 = vsub.f32 1.0, %v476
    %v478 = vmul.f32 %v475, %v477
    %v479 = vadd.f32 %v475, %v478
    %vm480 = vweird.f32 %v474
    %vm481 = vweird.f32 %v475
    %vm482 = vmor %vm480, %vm481
    %v483 = vsel %vm482, %v475, %v479
    %v484 = vand.u32 2147483647, %v474
    %vm485 = vcmp.eq.f32.partialorder %v484, 8.507059e+37
    %v486 = vand.u32 %v474, 2147483648
    %v487 = vor.u32 1.1754944e-38, %v486
    %v488 = vsel %vm485, %v487, %v483
    %v489 = vmul.f32 1.0, %v488
    %v490 = vadd.f32 %v470, %v192
    %v491 = vtanh.pop %v490
    %v492 = vmul.f32 %v195, %v491
    %v493 = vsub.f32 %v446, %v492
    %v494 = vmul.f32 %v489, %v493
    %v495 = vmul.f32 %v197, %v491
    %v496 = vadd.f32 %v494, %v495
    %497 = vst [vmem:[%s448] sm:$0xff] %v496
    %s498 = scalar_lea.vmem [#allocation11], 48
    %v499 = vld [vmem:[%s498] sm:$0xff]
    %500 = vmatpush.msra.mxu0 %v189
    %501 = vmatpush.msra.mxu0 %v188
    %502 = vmatpush.msra.mxu0 %v187
    %503 = vmatpush.msra.mxu0 %v186
    %504 = vmatpush.msra.mxu0 %v185
    %505 = vmatpush.msra.mxu0 %v184
    %506 = vmatpush.msra.mxu0 %v183
    %507 = vmatpush.msra.mxu0 %v182
    %508 = vmatpush.msra.mxu0 %v181
    %509 = vmatpush.msra.mxu0 %v180
    %510 = vmatpush.msra.mxu0 %v179
    %511 = vmatpush.msra.mxu0 %v178
    %512 = vmatpush.msra.mxu0 %v177
    %513 = vmatpush.msra.mxu0 %v176
    %514 = vmatpush.msra.mxu0 %v175
    %515 = vmatpush.msra.mxu0 %v174
    %516 = vmatmul.f32.gmra.mxu0 %v496
    %v517 = vpop.f32.mrf.mxu0
    %v518 = vadd.f32 0.0, %v517
    %519 = vdwg.mxu0
    %v520 = vadd.f32 %v499, %v518
    %v521 = vxor.u32 %v520, 2147483648
    %v522 = vmul.f32 %v521, 1.442695
    %v523 = vpow.pop %v522
    %v524 = vadd.f32 %v523, 1.0
    %v525 = vrcp.pop %v524
    %v526 = vmul.f32 %v524, %v525
    %v527 = vsub.f32 1.0, %v526
    %v528 = vmul.f32 %v525, %v527
    %v529 = vadd.f32 %v525, %v528
    %vm530 = vweird.f32 %v524
    %vm531 = vweird.f32 %v525
    %vm532 = vmor %vm530, %vm531
    %v533 = vsel %vm532, %v525, %v529
    %v534 = vand.u32 2147483647, %v524
    %vm535 = vcmp.eq.f32.partialorder %v534, 8.507059e+37
    %v536 = vand.u32 %v524, 2147483648
    %v537 = vor.u32 1.1754944e-38, %v536
    %v538 = vsel %vm535, %v537, %v533
    %v539 = vmul.f32 1.0, %v538
    %v540 = vadd.f32 %v520, %v192
    %v541 = vtanh.pop %v540
    %v542 = vmul.f32 %v195, %v541
    %v543 = vsub.f32 %v496, %v542
    %v544 = vmul.f32 %v539, %v543
    %v545 = vmul.f32 %v197, %v541
    %v546 = vadd.f32 %v544, %v545
    %547 = vst [vmem:[%s498] sm:$0xff] %v546
    %s548 = scalar_lea.vmem [#allocation11], 56
    %v549 = vld [vmem:[%s548] sm:$0xff]
    %550 = vmatpush.msra.mxu0 %v189
    %551 = vmatpush.msra.mxu0 %v188
    %552 = vmatpush.msra.mxu0 %v187
    %553 = vmatpush.msra.mxu0 %v186
    %554 = vmatpush.msra.mxu0 %v185
    %555 = vmatpush.msra.mxu0 %v184
    %556 = vmatpush.msra.mxu0 %v183
    %557 = vmatpush.msra.mxu0 %v182
    %558 = vmatpush.msra.mxu0 %v181
    %559 = vmatpush.msra.mxu0 %v180
    %560 = vmatpush.msra.mxu0 %v179
    %561 = vmatpush.msra.mxu0 %v178
    %562 = vmatpush.msra.mxu0 %v177
    %563 = vmatpush.msra.mxu0 %v176
    %564 = vmatpush.msra.mxu0 %v175
    %565 = vmatpush.msra.mxu0 %v174
    %566 = vmatmul.f32.gmra.mxu0 %v546
    %v567 = vpop.f32.mrf.mxu0
    %v568 = vadd.f32 0.0, %v567
    %569 = vdwg.mxu0
    %v570 = vadd.f32 %v549, %v568
    %v571 = vxor.u32 %v570, 2147483648
    %v572 = vmul.f32 %v571, 1.442695
    %v573 = vpow.pop %v572
    %v574 = vadd.f32 %v573, 1.0
    %v575 = vrcp.pop %v574
    %v576 = vmul.f32 %v574, %v575
    %v577 = vsub.f32 1.0, %v576
    %v578 = vmul.f32 %v575, %v577
    %v579 = vadd.f32 %v575, %v578
    %vm580 = vweird.f32 %v574
    %vm581 = vweird.f32 %v575
    %vm582 = vmor %vm580, %vm581
    %v583 = vsel %vm582, %v575, %v579
    %v584 = vand.u32 2147483647, %v574
    %vm585 = vcmp.eq.f32.partialorder %v584, 8.507059e+37
    %v586 = vand.u32 %v574, 2147483648
    %v587 = vor.u32 1.1754944e-38, %v586
    %v588 = vsel %vm585, %v587, %v583
    %v589 = vmul.f32 1.0, %v588
    %v590 = vadd.f32 %v570, %v192
    %v591 = vtanh.pop %v590
    %v592 = vmul.f32 %v195, %v591
    %v593 = vsub.f32 %v546, %v592
    %v594 = vmul.f32 %v589, %v593
    %v595 = vmul.f32 %v197, %v591
    %v596 = vadd.f32 %v594, %v595
    %597 = vst [vmem:[%s548] sm:$0xff] %v596
    %598 = vst [vmem:[#allocation2] sm:$0xff] %v596
    // Predicated region
    $region46: #{tpu_custom_call.1} parent=1 // pred_check
      _
    $region47: #{tpu_custom_call.1} parent=1 // pred_check_branch
      %600 = sbr.rel (0) target = $region49
    $region48: #{tpu_custom_call.1} parent=1 // pred_region
      %602 = vsyncadd [#allocation5], 0
      %s603 = sshll.u32 [#allocation11], 4
      %s604 = int_to_ptr.vmem [resolvable:$true] %s603
      %s605 = sshll.u32 %s6, 4
      %s606 = int_to_ptr.hbm [resolvable:$true] %s605
      %611 = dma.vmem_to_hbm [thread:$0]  %s604, 1024, %s606, [#allocation5], 128, 128, 8
    $region49: #{tpu_custom_call.1} parent=1 // pred_fallthru
      _
    // Predicated region
    $region50: #{tpu_custom_call.1} parent=1 // pred_check
      _
    $region51: #{tpu_custom_call.1} parent=1 // pred_check_branch
      %613 = sbr.rel (0) target = $region53
    $region52: #{tpu_custom_call.1} parent=1 // pred_region
      %615 = dma.done [#allocation5], 1024
    $region53: #{tpu_custom_call.1} parent=1 // pred_fallthru
      _
    %616 = vsyncpa [#allocation4], 1
    %617 = vsyncpa [#allocation9], 1
    %618 = vsyncpa [#allocation5], 1
    %619 = vsyncpa [#allocation6], 1

</llo_original>
